<compile_context>
chip_gen: v6e
topology: v6e:2x2x1
jax: 0.10.0
libtpu: 0.0.40
codegen_flags: <defaults>
</compile_context>

<pallas_src>
import functools

import jax
import jax.numpy as jnp
from jax.experimental import pallas as pl
from jax.experimental.pallas import tpu as pltpu

_BIG = 1e30   # sigmoid(+/-BIG - pred) saturates to exactly 1.0 / 0.0 in f32
_EPS = 1e-15  # NOTE: 1.0 - 1e-15 rounds to 1.0 in f32 (matches an f32 torch run)


def _round_up(x, m):
    return ((x + m - 1) // m) * m


def _ordinal_kernel(cut_ref, pred_ref, out_ref, *, num_class):
    # cut_ref : (c_pad, 1)        resident constants; rows >= num_class-1 hold +BIG
    # pred_ref: (1, tile)
    # out_ref : (num_class, tile)
    pred = pred_ref[...]                                       # (1, T)
    sig = jax.nn.sigmoid(cut_ref[...] - pred)                  # (c_pad, T): ONE EUP pass
    # sig_lo[i] = sig[i-1] for i >= 1, sig_lo[0] = 0  (== sigmoid(-inf - pred))
    lo = pltpu.roll(sig, shift=1, axis=0)                      # XLU sublane rotate
    row = jax.lax.broadcasted_iota(jnp.int32, sig.shape, 0)
    lo = jnp.where(row == 0, 0.0, lo)                          # VPU select
    link = sig - lo
    out_ref[...] = jnp.clip(link[:num_class, :], _EPS, 1.0 - _EPS).astype(out_ref.dtype)


@functools.partial(
    jax.jit,
    static_argnames=("tile_n", "out_dtype", "class_major", "vmem_limit_bytes"))
def ordinal_regressor(pred, cutpoints, *, tile_n=65536, out_dtype=jnp.float32,
                      class_major=False, vmem_limit_bytes=32 * 1024 * 1024):
    """OrdinalRegressor.forward.

    pred: (N, 1) or (N,) float; cutpoints: (K,) float.
    Returns (N, K+1) likelihoods (PyTorch layout) by default, or (K+1, N) when
    class_major=True (avoids one full extra HBM pass over the output).
    """
    pred = pred.reshape(-1)
    n = pred.shape[0]
    k = cutpoints.shape[0]
    num_class = k + 1
    c_pad = _round_up(num_class, 8)                 # full sublane group(s)

    # Cutpoint column, padded with +BIG so padded rows give sigmoid == 1.0.
    cut_col = jnp.full((c_pad, 1), _BIG, dtype=jnp.float32)
    cut_col = cut_col.at[:k, 0].set(cutpoints.astype(jnp.float32))

    # --- lane tiling: big tiles, even step count, minimal padding waste ---
    lane_n = _round_up(max(n, 1), 128)
    steps = max(1, pl.cdiv(lane_n, tile_n))
    if steps == 1 and lane_n >= 4096:
        steps = 2                                   # let both v7x TCs get work
    if steps > 1 and steps % 2:
        steps += 1                                  # even split across 2 TCs
    tile = _round_up(pl.cdiv(lane_n, steps), 128)
    n_pad = steps * tile

    pred_row = pred.astype(jnp.float32).reshape(1, n)
    if n_pad != n:
        pred_row = jnp.pad(pred_row, ((0, 0), (0, n_pad - n)))

    out_bytes = jnp.dtype(out_dtype).itemsize
    cost = pl.CostEstimate(
        flops=6 * c_pad * n_pad,
        transcendentals=c_pad * n_pad,
        bytes_accessed=4 * n_pad + 4 * c_pad + out_bytes * num_class * n,
    )

    out_cm = pl.pallas_call(
        functools.partial(_ordinal_kernel, num_class=num_class),
        out_shape=jax.ShapeDtypeStruct((num_class, n), out_dtype),
        grid=(steps,),
        in_specs=[
            pl.BlockSpec((c_pad, 1), lambda i: (0, 0)),   # resident constants
            pl.BlockSpec((1, tile), lambda i: (0, i)),
        ],
        # Lane-dense class-major output; last block's overhang is masked.
        out_specs=pl.BlockSpec((num_class, tile), lambda i: (0, i)),
        compiler_params=pltpu.CompilerParams(
            dimension_semantics=("parallel",),
            vmem_limit_bytes=vmem_limit_bytes,
        ),
        cost_estimate=cost,
    )(cut_col, pred_row)

    if class_major:
        return out_cm                   # (num_class, N): no extra HBM pass
    return out_cm.T                     # PyTorch layout (N, num_class)


def make_cutpoints(num_class, scale=5.0):
    """Deterministic parameter init matching the PyTorch __init__."""
    num_cutpoints = num_class - 1
    return (jnp.arange(num_cutpoints, dtype=jnp.float32) * scale / (num_class - 2)
            - scale / 2.0)


def _reference(pred, cutpoints):
    pred = pred.reshape(-1, 1).astype(jnp.float32)
    sig = jax.nn.sigmoid(cutpoints[None, :].astype(jnp.float32) - pred)   # (N, K)
    link = jnp.concatenate(
        [sig[:, :1], sig[:, 1:] - sig[:, :-1], 1.0 - sig[:, -1:]], axis=1)
    return jnp.clip(link, _EPS, 1.0 - _EPS)


if __name__ == "__main__":
    num_class = 6
    batch = 8
    scale = 5.0

    cutpoints = make_cutpoints(num_class, scale)                  # (5,)
    key = jax.random.PRNGKey(0)
    pred = jax.random.normal(key, (batch, 1), dtype=jnp.float32)

    ref = _reference(pred, cutpoints)

    # PyTorch layout (default).
    out = ordinal_regressor(pred, cutpoints)
    out = jax.block_until_ready(out)
    assert out.shape == (batch, num_class), out.shape
    assert jnp.allclose(out, ref, atol=1e-6, rtol=1e-6), "mismatch (row-major)"

    # Class-major layout (no extra transpose pass).
    out_cm = ordinal_regressor(pred, cutpoints, class_major=True)
    out_cm = jax.block_until_ready(out_cm)
    assert out_cm.shape == (num_class, batch), out_cm.shape
    assert jnp.allclose(out_cm, ref.T, atol=1e-6, rtol=1e-6), "mismatch (class-major)"

    print("KERNEL_OK")
</pallas_src>

<mosaic_0001>
module attributes {stable_mosaic.version = 11 : i64} {
  func.func @_ordinal_kernel(%arg0: i32, %arg1: memref<8x1xf32, #tpu.memory_space<vmem>>, %arg2: memref<1x128xf32, #tpu.memory_space<vmem>>, %arg3: memref<6x128xf32, #tpu.memory_space<vmem>>) attributes {dimension_semantics = [#tpu.dimension_semantics<parallel>], iteration_bounds = array<i64: 1>, scalar_prefetch = 0 : i64, scratch_operands = 0 : i64, tpu.core_type = #tpu.core_type<tc>, window_params = [{pipeline_mode = #tpu.pipeline_mode<synchronous>, transform_indices = @transform_0, window_bounds = array<i64: 8, 1>}, {transform_indices = @transform_1, window_bounds = array<i64: 1, 128>}, {transform_indices = @transform_2, window_bounds = array<i64: 6, 128>}]} {
    %c0 = arith.constant 0 : index
    %c0_0 = arith.constant 0 : index
    %0 = vector.load %arg2[%c0, %c0_0] : memref<1x128xf32, #tpu.memory_space<vmem>>, vector<1x128xf32>
    %c0_1 = arith.constant 0 : index
    %c0_2 = arith.constant 0 : index
    %1 = vector.load %arg1[%c0_1, %c0_2] : memref<8x1xf32, #tpu.memory_space<vmem>>, vector<8x1xf32>
    %2 = vector.broadcast %1 : vector<8x1xf32> to vector<8x128xf32>
    %3 = vector.broadcast %0 : vector<1x128xf32> to vector<8x128xf32>
    %4 = arith.subf %2, %3 : vector<8x128xf32>
    %5 = arith.negf %4 : vector<8x128xf32>
    %6 = math.exp %5 : vector<8x128xf32>
    %cst = arith.constant 1.000000e+00 : f32
    %7 = vector.broadcast %cst : f32 to vector<8x128xf32>
    %8 = arith.addf %7, %6 : vector<8x128xf32>
    %9 = arith.divf %7, %8 : vector<8x128xf32>
    %c1_i32 = arith.constant 1 : i32
    %10 = tpu.dynamic_rotate %9 by %c1_i32 dim 0 : vector<8x128xf32>, i32 -> vector<8x128xf32>
    %11 = tpu.iota {dimensions = array<i32: 0>} : vector<8x128xi32>
    %c0_i32 = arith.constant 0 : i32
    %12 = vector.broadcast %c0_i32 : i32 to vector<8x128xi32>
    %13 = arith.cmpi eq, %11, %12 : vector<8x128xi32>
    %cst_3 = arith.constant 0.000000e+00 : f32
    %14 = vector.broadcast %cst_3 : f32 to vector<8x128xf32>
    %15 = arith.select %13, %14, %10 : vector<8x128xi1>, vector<8x128xf32>
    %16 = arith.subf %9, %15 : vector<8x128xf32>
    %17 = vector.extract_strided_slice %16 {offsets = [0, 0], sizes = [6, 128], strides = [1, 1]} : vector<8x128xf32> to vector<6x128xf32>
    %cst_4 = arith.constant 1.000000e-15 : f32
    %cst_5 = arith.constant 1.000000e+00 : f32
    %18 = vector.broadcast %cst_4 : f32 to vector<6x128xf32>
    %19 = arith.maximumf %18, %17 : vector<6x128xf32>
    %20 = vector.broadcast %cst_5 : f32 to vector<6x128xf32>
    %21 = arith.minimumf %20, %19 : vector<6x128xf32>
    %c0_6 = arith.constant 0 : index
    %c0_7 = arith.constant 0 : index
    %22 = vector.load %arg3[%c0_6, %c0_7] : memref<6x128xf32, #tpu.memory_space<vmem>>, vector<6x128xf32>
    tpu.vector_store %arg3[%c0_6, %c0_7], %21 {strides = array<i32>} : memref<6x128xf32, #tpu.memory_space<vmem>>, vector<6x128xf32>,
    return
  }
  func.func @transform_0(%arg0: i32) -> (i32, i32) {
    %c0_i32 = arith.constant 0 : i32
    %c0_i32_0 = arith.constant 0 : i32
    %c0_i32_1 = arith.constant 0 : i32
    return %c0_i32, %c0_i32_0 : i32, i32
  }
  func.func @transform_1(%arg0: i32) -> (i32, i32) {
    %c0_i32 = arith.constant 0 : i32
    %c0_i32_0 = arith.constant 0 : i32
    return %c0_i32, %arg0 : i32, i32
  }
  func.func @transform_2(%arg0: i32) -> (i32, i32) {
    %c0_i32 = arith.constant 0 : i32
    %c0_i32_0 = arith.constant 0 : i32
    return %c0_i32, %arg0 : i32, i32
  }
}

</mosaic_0001>

<llo_original>
// kernel: ordinal_regressor.1
$region0: #{ordinal_regressor.1}
  #allocation0 [shape = 'u32[]', space=smem, size = 0x4, offset = 0x4, fixed_abs, tag = 'smem constant byte address 0x4 - core index']
  #allocation1 [shape = 'u32[144,128]{1,0:T(1,128)}', space=vmem, size = 0x12000, scoped, tag = 'internal scratch']
  %s0 = inlined_call_operand.vmem [shape: f32[8,1], index: 0, kind: input, shape index: {}]
  %s1 = inlined_call_operand.vmem [shape: f32[1,128], index: 1, kind: input, shape index: {}]
  %s2 = inlined_call_operand.vmem [shape: f32[6,8], index: 2, kind: output, shape index: {}]
  %s3 = sld [smem:[#allocation0]]
  $region18: #{ordinal_regressor.1} parent=0
    _
  %s5 = ssub.s32 1, %s3
  %s6 = scalar_select 0, %s5, %s3
  // Predicated region
  $region2: #{ordinal_regressor.1} parent=0 // pred_check
    _
  $region3: #{ordinal_regressor.1} parent=0 // pred_check_branch
    %8 = sbr.rel (0) target = $region5
  $region4: #{ordinal_regressor.1} parent=0 // pred_region
    _
  $region5: #{ordinal_regressor.1} parent=0 // pred_fallthru
    _
  // Predicated region
  $region6: #{ordinal_regressor.1} parent=0 // pred_check
    _
  $region7: #{ordinal_regressor.1} parent=0 // pred_check_branch
    %10 = sbr.rel (0) target = $region9
  $region8: #{ordinal_regressor.1} parent=0 // pred_region
    _
  $region9: #{ordinal_regressor.1} parent=0 // pred_fallthru
    _
  %v11 = vld [vmem:[%s1] sm:$0x1]
  %v12 = vld [vmem:[%s0] sm:$0xff]
  %14 = vset.pattern.permute.xlu0 0
  %15 = vperm.xlu0 %14, %v12
  %v16 = vpop.permute.xlu0 %15
  %v19 = vlaneseq
  %v20 = vshrl.u32 %v19, 7
  %v21 = vsub.s32 0, %v20
  %v22 = vrot.slane %v11, %v21
  %v24 = vsub.f32 %v16, %v22
  %v25 = vxor.u32 %v24, 2147483648
  %v26 = vmul.f32 %v25, 1.442695
  %v27 = vpow.pop %v26
  %v28 = vadd.f32 %v27, 1.0
  %v29 = vrcp.pop %v28
  %v30 = vmul.f32 1.0, %v29
  %v31 = vrot.slane %v30, 7
  %v32 = vlaneseq
  %v33 = vshrl.u32 %v32, 7
  %vm34 = vcmp.eq.s32.totalorder %v33, 0
  %v35 = vsel %vm34, 0.0, %v31
  %v36 = vsub.f32 %v30, %v35
  %v37 = vmax.f32 %v36, 1e-15
  %v38 = vmin.f32 %v37, 1.0
  %39 = vst [vmem:[%s2] sm:$0x3f] %v38
  // Predicated region
  $region10: #{ordinal_regressor.1} parent=0 // pred_check
    _
  $region11: #{ordinal_regressor.1} parent=0 // pred_check_branch
    %41 = sbr.rel (0) target = $region13
  $region12: #{ordinal_regressor.1} parent=0 // pred_region
    _
  $region13: #{ordinal_regressor.1} parent=0 // pred_fallthru
    _
  // Predicated region
  $region14: #{ordinal_regressor.1} parent=0 // pred_check
    _
  $region15: #{ordinal_regressor.1} parent=0 // pred_check_branch
    %43 = sbr.rel (0) target = $region17
  $region16: #{ordinal_regressor.1} parent=0 // pred_region
    _
  $region17: #{ordinal_regressor.1} parent=0 // pred_fallthru
    _

</llo_original>
